<compile_context>
chip_gen: v6e
topology: v6e:2x2x1
jax: 0.10.0
libtpu: 0.0.40
codegen_flags: <defaults>
</compile_context>

<pallas_src>
import numpy as np
import jax
import jax.numpy as jnp
from jax import lax
from jax.experimental import pallas as pl
from jax.experimental.pallas import tpu as pltpu


_VMEM_LIMIT = 64 * 1024 * 1024        # above the 32 MiB scoped default
_LANE_TILE_MAX = 2048                 # pixel (lane) tile cap for row-free kernels


# ------------------------------- tile pickers ---------------------------------

def _pick_lane_tile(n, max_tile=_LANE_TILE_MAX):
    if n <= max_tile:
        return n
    for t in range(max_tile, 127, -128):
        if n % t == 0:
            return t
    return max_tile      # ragged last block: Pallas masks the partial stores


def _pick_attn_row_tile(H, W, max_pixels=4096):
    # Bound the transient (49, TH, W) score arrays; TH must divide H and be a
    # multiple of 8 (BlockSpec second-to-last-dim rule) unless TH == H.
    if H * W <= max_pixels:
        return H
    best = H
    for th in range(8, H, 8):
        if H % th == 0 and th * W <= max_pixels:
            best = th
    return best


# ----------------------------- Pallas kernels ----------------------------------

def _proj_kernel(x_ref, w_ref, b_ref, o_ref):
    # x_ref: (Cin, TN)  w_ref: (TOTAL, Cin)  b_ref: (TOTAL, 1)  o_ref: (TOTAL, TN)
    o_ref[...] = (jnp.dot(w_ref[...], x_ref[...],
                          preferred_element_type=jnp.float32) + b_ref[...])


def _make_attn_kernel(TH, H, W, D):
    K = 7
    HILO = TH + 6

    def kernel(q_ref, kpad_ref, vpad_ref, pe_ref, o_ref):
        # q_ref: (D, 1, TH, W)        kpad/vpad_ref: (D, 1, H+6, W+6)
        # pe_ref: (D, H+6, W+6)       o_ref: (D, 1, TH, W)
        if TH == H:
            kp = kpad_ref[:, 0]
            vp = vpad_ref[:, 0]
            pep = pe_ref[...]
        else:
            rt = pl.program_id(2)
            r0 = pl.multiple_of(rt * TH, TH)
            kp = kpad_ref[:, 0, pl.ds(r0, HILO), :]
            vp = vpad_ref[:, 0, pl.ds(r0, HILO), :]
            pep = pe_ref[:, pl.ds(r0, HILO), :]

        q = q_ref[:, 0]                                 # (D, TH, W), scale pre-folded
        pe_c = pep[:, 3:3 + TH, 3:3 + W]                # (D, TH, W) window centre pe
        q_pe = jnp.sum(q * pe_c, axis=0)                # tap-independent score term

        scores = []
        for kh in range(K):
            for kw in range(K):
                kk = kp[:, kh:kh + TH, kw:kw + W] - pep[:, kh:kh + TH, kw:kw + W]
                scores.append(jnp.sum(q * kk, axis=0) + q_pe)        # (TH, W)
        s = jnp.stack(scores, axis=0)                                 # (49, TH, W)
        s = s - jnp.max(s, axis=0, keepdims=True)
        e = jnp.exp(s)
        inv = pl.reciprocal(jnp.sum(e, axis=0, keepdims=True), approx=True)
        att = e * inv                                                 # softmax over window

        acc = jnp.zeros((D, TH, W), jnp.float32)
        t = 0
        for kh in range(K):
            for kw in range(K):
                acc = acc + att[t][None, :, :] * vp[:, kh:kh + TH, kw:kw + W]
                t += 1
        o_ref[:, 0] = acc

    return kernel


def _make_depconv_kernel(H, W, head):
    def kernel(f_ref, w_ref, b_ref, o_ref):
        # f_ref: (9, 1, H+2, W+2)  w_ref: (1, 9, head, 9)  b_ref: (1, head, 1)
        # o_ref: (head, 1, H, W)
        fp = f_ref[:, 0]                                  # (9, H+2, W+2)
        acc = jnp.zeros((head, H * W), jnp.float32) + b_ref[0]
        for kh in range(3):
            for kw in range(3):
                slab = fp[:, kh:kh + H, kw:kw + W].reshape(9, H * W)
                acc = acc + jnp.dot(w_ref[0, kh * 3 + kw], slab,
                                    preferred_element_type=jnp.float32)
        o_ref[:, 0] = acc.reshape(head, H, W)
    return kernel


def _make_epilogue_kernel(r1, r2, alpha, has_skip_proj):
    # combine -> GDN1 -> PReLU -> conv2(1x1) -> GDN2 -> (+skip) -> PReLU
    def gdn(t, g_ref, b_ref):
        n = jnp.dot(g_ref[...], t * t, preferred_element_type=jnp.float32) + b_ref[...]
        return t * lax.rsqrt(n)

    def prelu(t):
        return jnp.where(t > 0, t, alpha * t)

    if has_skip_proj:
        def kernel(att_ref, cnv_ref, x_ref, g1_ref, bb1_ref, w2_ref, b2_ref,
                   g2_ref, bb2_ref, w3_ref, b3_ref, o_ref):
            t = r1 * att_ref[...] + r2 * cnv_ref[...]
            t = prelu(gdn(t, g1_ref, bb1_ref))
            t = jnp.dot(w2_ref[...], t, preferred_element_type=jnp.float32) + b2_ref[...]
            t = gdn(t, g2_ref, bb2_ref)
            skip = jnp.dot(w3_ref[...], x_ref[...],
                           preferred_element_type=jnp.float32) + b3_ref[...]
            o_ref[...] = prelu(t + skip)
    else:
        def kernel(att_ref, cnv_ref, x_ref, g1_ref, bb1_ref, w2_ref, b2_ref,
                   g2_ref, bb2_ref, o_ref):
            t = r1 * att_ref[...] + r2 * cnv_ref[...]
            t = prelu(gdn(t, g1_ref, bb1_ref))
            t = jnp.dot(w2_ref[...], t, preferred_element_type=jnp.float32) + b2_ref[...]
            t = gdn(t, g2_ref, bb2_ref)
            o_ref[...] = prelu(t + x_ref[...])
    return kernel


# --------------------------- pallas_call wrappers ------------------------------

def pallas_proj(x_cm, w_all, b_all):
    Cin, N = x_cm.shape
    TOTAL = w_all.shape[0]
    TN = _pick_lane_tile(N)
    return pl.pallas_call(
        _proj_kernel,
        out_shape=jax.ShapeDtypeStruct((TOTAL, N), jnp.float32),
        grid=(pl.cdiv(N, TN),),
        in_specs=[
            pl.BlockSpec((Cin, TN), lambda i: (0, i)),
            pl.BlockSpec((TOTAL, Cin), lambda i: (0, 0)),
            pl.BlockSpec((TOTAL, 1), lambda i: (0, 0)),
        ],
        out_specs=pl.BlockSpec((TOTAL, TN), lambda i: (0, i)),
        compiler_params=pltpu.CompilerParams(
            dimension_semantics=("parallel",),
            vmem_limit_bytes=_VMEM_LIMIT),
    )(x_cm, w_all, b_all.reshape(-1, 1))


def pallas_acmix_attention(qkvf_im, kpad, vpad, pe_pad, head, D):
    # qkvf_im: (TOTAL, B, H, W) -- q heads live in rows [0, head*D)
    # kpad/vpad: (head*D, B, H+6, W+6) reflect-padded ; pe_pad: (D, H+6, W+6)
    TOTAL, B, H, W = qkvf_im.shape
    Cout = head * D
    Hp, Wp = H + 6, W + 6
    TH = _pick_attn_row_tile(H, W)
    NRT = H // TH
    return pl.pallas_call(
        _make_attn_kernel(TH, H, W, D),
        out_shape=jax.ShapeDtypeStruct((Cout, B, H, W), jnp.float32),
        grid=(B, head, NRT),
        in_specs=[
            pl.BlockSpec((D, 1, TH, W), lambda b, h, rt: (h, b, rt, 0)),
            pl.BlockSpec((D, 1, Hp, Wp), lambda b, h, rt: (h, b, 0, 0)),
            pl.BlockSpec((D, 1, Hp, Wp), lambda b, h, rt: (h, b, 0, 0)),
            pl.BlockSpec((D, Hp, Wp), lambda b, h, rt: (0, 0, 0)),
        ],
        out_specs=pl.BlockSpec((D, 1, TH, W), lambda b, h, rt: (h, b, rt, 0)),
        compiler_params=pltpu.CompilerParams(
            dimension_semantics=("parallel", "parallel", "arbitrary"),
            vmem_limit_bytes=_VMEM_LIMIT),
    )(qkvf_im, kpad, vpad, pe_pad)


def pallas_depconv3x3(f_pad, w_gk, b_g):
    # f_pad: (9*D, B, H+2, W+2) zero-padded, channel order d*9 + i
    # w_gk:  (D, 9taps, head, 9)   b_g: (D, head, 1)
    nineD, B, Hp2, Wp2 = f_pad.shape
    D = nineD // 9
    head = w_gk.shape[2]
    H, W = Hp2 - 2, Wp2 - 2
    Cout = D * head
    return pl.pallas_call(
        _make_depconv_kernel(H, W, head),
        out_shape=jax.ShapeDtypeStruct((Cout, B, H, W), jnp.float32),
        grid=(B, D),
        in_specs=[
            pl.BlockSpec((9, 1, Hp2, Wp2), lambda b, g: (g, b, 0, 0)),
            pl.BlockSpec((1, 9, head, 9), lambda b, g: (g, 0, 0, 0)),
            pl.BlockSpec((1, head, 1), lambda b, g: (g, 0, 0)),
        ],
        out_specs=pl.BlockSpec((head, 1, H, W), lambda b, g: (g, b, 0, 0)),
        compiler_params=pltpu.CompilerParams(
            dimension_semantics=("parallel", "parallel"),
            vmem_limit_bytes=_VMEM_LIMIT),
    )(f_pad, w_gk, b_g)


def pallas_epilogue(att_cm, conv_cm, x_cm, p):
    Cout, N = att_cm.shape
    Cin = x_cm.shape[0]
    if not p['use_conv1x1']:
        assert Cin == Cout, "identity skip requires in_channels == out_channels"
    TN = _pick_lane_tile(N)
    consts = [p['gdn1']['gammaT'].T, p['gdn1']['beta'].reshape(-1, 1),
              p['w_conv2'], p['b_conv2'].reshape(-1, 1),
              p['gdn2']['gammaT'].T, p['gdn2']['beta'].reshape(-1, 1)]
    if p['use_conv1x1']:
        consts += [p['w_conv3'], p['b_conv3'].reshape(-1, 1)]
    row_specs = [pl.BlockSpec((Cout, TN), lambda i: (0, i)),
                 pl.BlockSpec((Cout, TN), lambda i: (0, i)),
                 pl.BlockSpec((Cin, TN), lambda i: (0, i))]
    const_specs = [pl.BlockSpec(c.shape, lambda i, nd=c.ndim: (0,) * nd)
                   for c in consts]
    kernel = _make_epilogue_kernel(float(p['rate1']), float(p['rate2']),
                                   float(p['prelu_alpha']), p['use_conv1x1'])
    return pl.pallas_call(
        kernel,
        out_shape=jax.ShapeDtypeStruct((Cout, N), jnp.float32),
        grid=(pl.cdiv(N, TN),),
        in_specs=row_specs + const_specs,
        out_specs=pl.BlockSpec((Cout, TN), lambda i: (0, i)),
        compiler_params=pltpu.CompilerParams(
            dimension_semantics=("parallel",),
            vmem_limit_bytes=_VMEM_LIMIT),
    )(att_cm, conv_cm, x_cm, *consts)


# ------------------------- shared (layout) helpers -----------------------------

def positional_encoding(H, W, wp, bp):
    loc_w = jnp.broadcast_to(jnp.linspace(-1.0, 1.0, W)[None, :], (H, W))
    loc_h = jnp.broadcast_to(jnp.linspace(-1.0, 1.0, H)[:, None], (H, W))
    loc = jnp.stack([loc_w, loc_h], axis=0)[None].astype(jnp.float32)  # (1,2,H,W)
    return jnp.einsum('oc,bchw->bohw', wp, loc) + bp[None, :, None, None]


def unfold_reflect(t, K, pad):
    # ReflectionPad2d(pad) + nn.Unfold(K, stride=1): (N,C,H,W) -> (N,C,K*K,H,W)
    N, C, H, W = t.shape
    tp = jnp.pad(t, ((0, 0), (0, 0), (pad, pad), (pad, pad)), mode='reflect')
    wins = [tp[:, :, kh:kh + H, kw:kw + W] for kh in range(K) for kw in range(K)]
    return jnp.stack(wins, axis=2)


# ------------------------------ Pallas forward ---------------------------------

def encoder_forward_pallas(x, p):
    B, Cin, H, W = x.shape
    head, D = p['head'], p['head_dim']
    Cout = head * D
    N = B * H * W
    TOTAL = 3 * Cout + 9 * D

    # channel-major, pixel-lane-dense input
    x_cm = x.transpose(1, 0, 2, 3).reshape(Cin, N)

    # fused 1x1 projection: rows = [ q*scale | k | v | fc-mixed conv features ]
    qkvf = pallas_proj(x_cm, p['w_all'], p['b_all'])            # (TOTAL, N)
    qkvf_im = qkvf.reshape(TOTAL, B, H, W)                      # free reshape

    # reflect-padded K/V halo images (no 49x unfold any more)
    kpad = jnp.pad(qkvf_im[Cout:2 * Cout],
                   ((0, 0), (0, 0), (3, 3), (3, 3)), mode='reflect')
    vpad = jnp.pad(qkvf_im[2 * Cout:3 * Cout],
                   ((0, 0), (0, 0), (3, 3), (3, 3)), mode='reflect')
    pe = positional_encoding(H, W, p['wp'], p['bp'])[0]         # (D, H, W)
    pe_pad = jnp.pad(pe, ((0, 0), (3, 3), (3, 3)), mode='reflect')

    # attention kernel reads q directly from qkvf_im (rows [0, Cout))
    out_att = pallas_acmix_attention(qkvf_im, kpad, vpad, pe_pad, head, D)

    # grouped 3x3 conv branch (zero padding), tiled over (batch, group)
    f_pad = jnp.pad(qkvf_im[3 * Cout:], ((0, 0), (0, 0), (1, 1), (1, 1)))
    out_conv = pallas_depconv3x3(f_pad, p['w_gk'], p['b_g'])

    # fused epilogue: combine/GDN1/PReLU/conv2/GDN2/skip/add/PReLU
    out_cm = pallas_epilogue(out_att.reshape(Cout, N),
                             out_conv.reshape(Cout, N), x_cm, p)
    return out_cm.reshape(Cout, B, H, W).transpose(1, 0, 2, 3)


# --------------------------- pure-JAX reference --------------------------------

def encoder_forward_ref(x, p):
    B, Cin, H, W = x.shape
    head, D = p['head'], p['head_dim']
    Cout = head * D
    a = p['prelu_alpha']

    def conv1x1(t, w, b):
        return jnp.einsum('oc,bchw->bohw', w, t) + b[None, :, None, None]

    q = conv1x1(x, p['wq'], p['bq'])
    k = conv1x1(x, p['wk'], p['bk'])
    v = conv1x1(x, p['wv'], p['bv'])

    pe = positional_encoding(H, W, p['wp'], p['bp'])
    scaling = float(D) ** -0.5
    q_att = (q * scaling).reshape(B * head, D, H, W)
    k_att = k.reshape(B * head, D, H, W)
    v_att = v.reshape(B * head, D, H, W)

    k_unf = unfold_reflect(k_att, 7, 3)
    v_unf = unfold_reflect(v_att, 7, 3)
    delta = pe[:, :, None] - unfold_reflect(pe, 7, 3)           # (1, D, 49, H, W)
    s = jnp.sum(q_att[:, :, None] * (k_unf + delta), axis=1)
    att = jax.nn.softmax(s, axis=1)
    out_att = jnp.sum(att[:, None] * v_unf, axis=2).reshape(B, Cout, H, W)

    f_in = jnp.concatenate([q.reshape(B, head, D, H * W),
                            k.reshape(B, head, D, H * W),
                            v.reshape(B, head, D, H * W)], axis=1)
    f_all = jnp.einsum('ij,bjdp->bidp', p['w_fc'], f_in)        # (B, 9, D, HW)
    f_conv = f_all.transpose(0, 2, 1, 3).reshape(B, D * 9, H, W)
    out_conv = lax.conv_general_dilated(
        f_conv, p['w_dep'], window_strides=(1, 1), padding=((1, 1), (1, 1)),
        dimension_numbers=('NCHW', 'OIHW', 'NCHW'), feature_group_count=D)
    out_conv = out_conv + p['b_dep'][None, :, None, None]

    out = p['rate1'] * out_att + p['rate2'] * out_conv

    def gdn(t, gp):
        tc = t.transpose(0, 2, 3, 1)
        n = (tc * tc) @ gp['gammaT'] + gp['beta']
        return (tc / jnp.sqrt(n)).transpose(0, 3, 1, 2)

    out = gdn(out, p['gdn1'])
    out = jnp.where(out > 0, out, a * out)
    out = conv1x1(out, p['w_conv2'], p['b_conv2'])
    out = gdn(out, p['gdn2'])
    skip = conv1x1(x, p['w_conv3'], p['b_conv3']) if p['use_conv1x1'] else x
    s2 = out + skip
    return jnp.where(s2 > 0, s2, a * s2)


# ------------------------------ parameter setup --------------------------------

def make_params(key, in_channels, out_channels, head=4, use_conv1x1=True):
    D = out_channels // head
    keys = jax.random.split(key, 12)

    def nrm(k, shape, s=0.1):
        return s * jax.random.normal(k, shape, jnp.float32)

    def gdn_params(k):
        reparam_offset = 2.0 ** -18
        pedestal = reparam_offset ** 2
        beta_bound = (1e-6 + pedestal) ** 0.5
        gamma_bound = reparam_offset
        beta_p = jnp.sqrt(jnp.ones((out_channels,)) + pedestal)
        gamma_p = jnp.sqrt(0.1 * jnp.eye(out_channels) + pedestal
                           + 0.01 * jnp.abs(jax.random.normal(k, (out_channels, out_channels))))
        beta = jnp.maximum(beta_p, beta_bound) ** 2 - pedestal
        gamma = jnp.maximum(gamma_p, gamma_bound) ** 2 - pedestal   # gamma[o, i]
        return dict(gammaT=gamma.T.astype(jnp.float32), beta=beta.astype(jnp.float32))

    wq = nrm(keys[0], (out_channels, in_channels)); bq = nrm(keys[0], (out_channels,), 0.02)
    wk = nrm(keys[1], (out_channels, in_channels)); bk = nrm(keys[1], (out_channels,), 0.02)
    wv = nrm(keys[2], (out_channels, in_channels)); bv = nrm(keys[2], (out_channels,), 0.02)
    wp = nrm(keys[3], (D, 2)); bp = nrm(keys[3], (D,), 0.02)
    w_fc = nrm(keys[4], (9, 3 * head))
    b_dep = nrm(keys[5], (out_channels,), 0.02)
    w_dep = nrm(keys[6], (out_channels, 9, 3, 3))

    params = dict(
        head=head, head_dim=D,
        wq=wq, bq=bq, wk=wk, bk=bk, wv=wv, bv=bv, wp=wp, bp=bp,
        w_fc=w_fc, w_dep=w_dep, b_dep=b_dep,
        rate1=0.5, rate2=0.5, prelu_alpha=0.25,
        gdn1=gdn_params(keys[7]), gdn2=gdn_params(keys[8]),
        w_conv2=nrm(keys[9], (out_channels, out_channels)),
        b_conv2=nrm(keys[9], (out_channels,), 0.02),
        use_conv1x1=use_conv1x1,
    )
    if use_conv1x1:
        params['w_conv3'] = nrm(keys[10], (out_channels, in_channels))
        params['b_conv3'] = nrm(keys[10], (out_channels,), 0.02)

    # --- derived weights for the fused Pallas kernels (exact refactorings) ----
    # Fold ACmix's 1x1 fc mixing (conv branch) into the q/k/v projection and the
    # attention scaling (D**-0.5) into the q rows of the fused projection.
    Wr = jnp.stack([wq, wk, wv], 0).reshape(3, head, D, in_channels)
    br = jnp.stack([bq, bk, bv], 0).reshape(3, head, D)
    wfc_r = w_fc.reshape(9, 3, head)
    Wf = jnp.einsum('ich,chdk->dik', wfc_r, Wr).reshape(D * 9, in_channels)
    bf = jnp.einsum('ich,chd->di', wfc_r, br).reshape(D * 9)
    scaling = float(D) ** -0.5
    params['w_all'] = jnp.concatenate([wq * scaling, wk, wv, Wf], axis=0)  # (TOTAL, Cin)
    params['b_all'] = jnp.concatenate([bq * scaling, bk, bv, bf], axis=0)

    # Per-group / per-tap weights for the grouped dep_conv (group g = o // head).
    w_dep_np = np.asarray(w_dep)                       # (Cout, 9, 3, 3)
    w_gk = np.zeros((D, 9, head, 9), np.float32)       # (group, tap, out-in-group, in-in-group)
    for g in range(D):
        for oh in range(head):
            for il in range(9):
                for kh in range(3):
                    for kw in range(3):
                        w_gk[g, kh * 3 + kw, oh, il] = w_dep_np[g * head + oh, il, kh, kw]
    params['w_gk'] = jnp.asarray(w_gk)
    params['b_g'] = jnp.asarray(np.asarray(b_dep).reshape(D, head, 1))
    return params


# ----------------------------------- main ---------------------------------------

if __name__ == "__main__":
    key = jax.random.PRNGKey(0)
    kx, kp = jax.random.split(key)

    B, Cin, H, W = 2, 4, 16, 16
    Cout = 8
    x = jax.random.normal(kx, (B, Cin, H, W), jnp.float32)
    params = make_params(kp, Cin, Cout, head=4, use_conv1x1=True)

    out = encoder_forward_pallas(x, params)
    out = jax.block_until_ready(out)

    ref = encoder_forward_ref(x, params)
    ref = jax.block_until_ready(ref)

    assert out.shape == (B, Cout, H, W), out.shape
    err = float(jnp.max(jnp.abs(out - ref)))
    assert err < 2e-3, f"Pallas/ref mismatch: {err}"
    print("KERNEL_OK")
</pallas_src>

<mosaic_0001>
module attributes {stable_mosaic.version = 11 : i64} {
  func.func @_proj_kernel(%arg0: i32, %arg1: memref<4x512xf32, #tpu.memory_space<vmem>>, %arg2: memref<42x4xf32, #tpu.memory_space<vmem>>, %arg3: memref<42x1xf32, #tpu.memory_space<vmem>>, %arg4: memref<42x512xf32, #tpu.memory_space<vmem>>) attributes {dimension_semantics = [#tpu.dimension_semantics<parallel>], iteration_bounds = array<i64: 1>, scalar_prefetch = 0 : i64, scratch_operands = 0 : i64, tpu.core_type = #tpu.core_type<tc>, window_params = [{transform_indices = @transform_0, window_bounds = array<i64: 4, 512>}, {pipeline_mode = #tpu.pipeline_mode<synchronous>, transform_indices = @transform_1, window_bounds = array<i64: 42, 4>}, {pipeline_mode = #tpu.pipeline_mode<synchronous>, transform_indices = @transform_2, window_bounds = array<i64: 42, 1>}, {transform_indices = @transform_3, window_bounds = array<i64: 42, 512>}]} {
    %c0 = arith.constant 0 : index
    %c0_0 = arith.constant 0 : index
    %0 = vector.load %arg2[%c0, %c0_0] : memref<42x4xf32, #tpu.memory_space<vmem>>, vector<42x4xf32>
    %c0_1 = arith.constant 0 : index
    %c0_2 = arith.constant 0 : index
    %1 = vector.load %arg1[%c0_1, %c0_2] : memref<4x512xf32, #tpu.memory_space<vmem>>, vector<4x512xf32>
    %cst = arith.constant dense<0.000000e+00> : vector<42x512xf32>
    %2 = tpu.matmul %0, %1, %cst {dimension_numbers = #tpu.dot_dimension_numbers<[1], [0], [0], [1], [0, 0, 1, 1], [], []>} : vector<42x4xf32>, vector<4x512xf32>, vector<42x512xf32> -> vector<42x512xf32>
    %c0_3 = arith.constant 0 : index
    %c0_4 = arith.constant 0 : index
    %3 = vector.load %arg3[%c0_3, %c0_4] : memref<42x1xf32, #tpu.memory_space<vmem>>, vector<42x1xf32>
    %4 = vector.broadcast %3 : vector<42x1xf32> to vector<42x512xf32>
    %5 = arith.addf %2, %4 : vector<42x512xf32>
    %c0_5 = arith.constant 0 : index
    %c0_6 = arith.constant 0 : index
    %6 = vector.load %arg4[%c0_5, %c0_6] : memref<42x512xf32, #tpu.memory_space<vmem>>, vector<42x512xf32>
    tpu.vector_store %arg4[%c0_5, %c0_6], %5 {strides = array<i32>} : memref<42x512xf32, #tpu.memory_space<vmem>>, vector<42x512xf32>,
    return
  }
  func.func @transform_0(%arg0: i32) -> (i32, i32) {
    %c0_i32 = arith.constant 0 : i32
    %c0_i32_0 = arith.constant 0 : i32
    return %c0_i32, %arg0 : i32, i32
  }
  func.func @transform_1(%arg0: i32) -> (i32, i32) {
    %c0_i32 = arith.constant 0 : i32
    %c0_i32_0 = arith.constant 0 : i32
    %c0_i32_1 = arith.constant 0 : i32
    return %c0_i32, %c0_i32_0 : i32, i32
  }
  func.func @transform_2(%arg0: i32) -> (i32, i32) {
    %c0_i32 = arith.constant 0 : i32
    %c0_i32_0 = arith.constant 0 : i32
    %c0_i32_1 = arith.constant 0 : i32
    return %c0_i32, %c0_i32_0 : i32, i32
  }
  func.func @transform_3(%arg0: i32) -> (i32, i32) {
    %c0_i32 = arith.constant 0 : i32
    %c0_i32_0 = arith.constant 0 : i32
    return %c0_i32, %arg0 : i32, i32
  }
}

</mosaic_0001>

<llo_original>
// kernel: tpu_custom_call.1
$region0: #{tpu_custom_call.1}
  #allocation0 [shape = 'u32[]', space=smem, size = 0x4, offset = 0x4, fixed_abs, tag = 'smem constant byte address 0x4 - core index']
  #allocation1 [shape = 'u32[144,128]{1,0:T(1,128)}', space=vmem, size = 0x12000, scoped, tag = 'internal scratch']
  %s0 = inlined_call_operand.vmem [shape: f32[4,512], index: 0, kind: input, shape index: {}]
  %s1 = inlined_call_operand.vmem [shape: f32[42,4], index: 1, kind: input, shape index: {}]
  %s2 = inlined_call_operand.vmem [shape: f32[42,1], index: 2, kind: input, shape index: {}]
  %s3 = inlined_call_operand.hbm [shape: f32[42,512], index: 3, kind: output, shape index: {}]
  %s4 = sld [smem:[#allocation0]]
  $region22: #{tpu_custom_call.1} parent=0
    _
  %s6 = ssub.s32 1, %s4
  %s7 = scalar_select 0, %s6, %s4
  $region1: #{tpu_custom_call.1} parent=0
    #allocation2 [shape = 'u8[98304]{0}', space=vmem, size = 0x18000, scoped, tag = 'output window, operand 0, single buffered']
    #allocation3 [shape = 's32[1]{0}', space=sflag, size = 0x4, scoped, tag = 'scoped memory for tpu_custom_call.1']
    %8 = vsyncpa [#allocation3], 0
    // Predicated region
    $region2: #{tpu_custom_call.1} parent=1 // pred_check
      _
    $region3: #{tpu_custom_call.1} parent=1 // pred_check_branch
      %10 = sbr.rel (0) target = $region5
    $region4: #{tpu_custom_call.1} parent=1 // pred_region
      _
    $region5: #{tpu_custom_call.1} parent=1 // pred_fallthru
      _
    // Predicated region
    $region6: #{tpu_custom_call.1} parent=1 // pred_check
      _
    $region7: #{tpu_custom_call.1} parent=1 // pred_check_branch
      %12 = sbr.rel (0) target = $region9
    $region8: #{tpu_custom_call.1} parent=1 // pred_region
      _
    $region9: #{tpu_custom_call.1} parent=1 // pred_fallthru
      _
    // Predicated region
    $region10: #{tpu_custom_call.1} parent=1 // pred_check
      _
    $region11: #{tpu_custom_call.1} parent=1 // pred_check_branch
      %14 = sbr.rel (0) target = $region13
    $region12: #{tpu_custom_call.1} parent=1 // pred_region
      _
    $region13: #{tpu_custom_call.1} parent=1 // pred_fallthru
      _
    %v15 = vld [vmem:[%s1] sm:$0xff]
    %v16 = vld [vmem:[%s1 + $0x8] sm:$0xff]
    %v17 = vld [vmem:[%s1 + $0x10] sm:$0xff]
    %v18 = vld [vmem:[%s1 + $0x18] sm:$0xff]
    %v19 = vld [vmem:[%s1 + $0x20] sm:$0xff]
    %v20 = vld [vmem:[%s1 + $0x28] sm:$0x3]
    %v21 = vld [vmem:[%s0] sm:$0xff]
    %v22 = vld [vmem:[%s0 + $0x8] sm:$0xff]
    %v23 = vld [vmem:[%s2] sm:$0xff]
    %v24 = vld [vmem:[%s2 + $0x8] sm:$0xff]
    %v25 = vld [vmem:[%s2 + $0x10] sm:$0xff]
    %v26 = vld [vmem:[%s2 + $0x18] sm:$0xff]
    %v27 = vld [vmem:[%s2 + $0x20] sm:$0xff]
    %v28 = vld [vmem:[%s2 + $0x28] sm:$0x3]
    %30 = vset.pattern.permute.xlu0 0
    %31 = vperm.xlu0 %30, %v23
    %v32 = vpop.permute.xlu0 %31
    %35 = vset.pattern.permute.xlu0 0
    %36 = vperm.xlu0 %35, %v24
    %v37 = vpop.permute.xlu0 %36
    %40 = vset.pattern.permute.xlu0 0
    %41 = vperm.xlu0 %40, %v25
    %v42 = vpop.permute.xlu0 %41
    %45 = vset.pattern.permute.xlu0 0
    %46 = vperm.xlu0 %45, %v26
    %v47 = vpop.permute.xlu0 %46
    %50 = vset.pattern.permute.xlu0 0
    %51 = vperm.xlu0 %50, %v27
    %v52 = vpop.permute.xlu0 %51
    %55 = vset.pattern.permute.xlu0 0
    %56 = vperm.xlu0 %55, %v28
    %v57 = vpop.permute.xlu0 %56
    %v61 = vcombine.high %v21, %v21
    %v62 = vcombine.high %v22, %v22
    %vm63 = vcmask 31744
    %v65 = vsel %vm63, %v15, 0
    %v68 = vsel %vm63, %v16, 0
    %v71 = vsel %vm63, %v17, 0
    %v74 = vsel %vm63, %v18, 0
    %v77 = vsel %vm63, %v19, 0
    %v80 = vsel %vm63, %v20, 0
    %vm82 = vcmask 1043456
    %v83 = vsel %vm82, %v21, 0
    %v85 = vsel %vm82, %v61, 0
    %v87 = vsel %vm82, %v22, 0
    %v89 = vsel %vm82, %v62, 0
    %91 = vmatprep.subr.mxu0 0.0
    %92 = vmatpush1.msra.mxu0 0.0
    %93 = vmatprep.subr.mxu0 0.0
    %94 = vmatpush1.msra.mxu0 0.0
    %95 = vmatprep.subr.mxu0 0.0
    %96 = vmatpush1.msra.mxu0 0.0
    %97 = vmatprep.subr.mxu0 0.0
    %98 = vmatpush1.msra.mxu0 0.0
    %99 = vmatprep.subr.mxu0 0.0
    %100 = vmatpush1.msra.mxu0 0.0
    %101 = vmatprep.subr.mxu0 0.0
    %102 = vmatpush1.msra.mxu0 0.0
    %103 = vmatprep.subr.mxu0 0.0
    %104 = vmatpush1.msra.mxu0 0.0
    %105 = vmatprep.subr.mxu0 0.0
    %106 = vmatpush1.msra.mxu0 0.0
    %107 = vmatprep.subr.mxu0 0.0
    %108 = vmatpush1.msra.mxu0 0.0
    %109 = vmatprep.subr.mxu0 0.0
    %110 = vmatpush1.msra.mxu0 0.0
    %111 = vmatprep.subr.mxu0 0.0
    %112 = vmatpush1.msra.mxu0 0.0
    %113 = vmatprep.subr.mxu0 0.0
    %114 = vmatpush1.msra.mxu0 0.0
    %115 = vmatprep.subr.mxu0 0.0
    %116 = vmatpush1.msra.mxu0 0.0
    %117 = vmatprep.subr.mxu0 0.0
    %118 = vmatpush1.msra.mxu0 0.0
    %119 = vmatprep.subr.mxu0 0.0
    %120 = vmatpush1.msra.mxu0 0.0
    %121 = vmatprep.subr.mxu0 %v85
    %122 = vmatpush1.msra.mxu0 %v83
    %123 = vmatprep.subr.mxu0 0.0
    %124 = vmatpush2.msra.mxu0 0.0
    %125 = vmatprep.subr.mxu0 0.0
    %126 = vmatpush2.msra.mxu0 0.0
    %127 = vmatprep.subr.mxu0 0.0
    %128 = vmatpush2.msra.mxu0 0.0
    %129 = vmatprep.subr.mxu0 0.0
    %130 = vmatpush2.msra.mxu0 0.0
    %131 = vmatprep.subr.mxu0 0.0
    %132 = vmatpush2.msra.mxu0 0.0
    %133 = vmatprep.subr.mxu0 0.0
    %134 = vmatpush2.msra.mxu0 0.0
    %135 = vmatprep.subr.mxu0 0.0
    %136 = vmatpush2.msra.mxu0 0.0
    %137 = vmatprep.subr.mxu0 0.0
    %138 = vmatpush2.msra.mxu0 0.0
    %139 = vmatprep.subr.mxu0 0.0
    %140 = vmatpush2.msra.mxu0 0.0
    %141 = vmatprep.subr.mxu0 0.0
    %142 = vmatpush2.msra.mxu0 0.0
    %143 = vmatprep.subr.mxu0 0.0
    %144 = vmatpush2.msra.mxu0 0.0
    %145 = vmatprep.subr.mxu0 0.0
    %146 = vmatpush2.msra.mxu0 0.0
    %147 = vmatprep.subr.mxu0 0.0
    %148 = vmatpush2.msra.mxu0 0.0
    %149 = vmatprep.subr.mxu0 0.0
    %150 = vmatpush2.msra.mxu0 0.0
    %151 = vmatprep.subr.mxu0 0.0
    %152 = vmatpush2.msra.mxu0 0.0
    %153 = vmatprep.subr.mxu0 0.0
    %154 = vmatpush2.msra.mxu0 0.0
    %155 = vmatprep.mubr.f32.mxu0 0.0
    %156 = vmatmul.mubr.f32.gmra.mxu0 %v65
    %v157 = vpop.f32.mrf.mxu0
    %v158 = vadd.f32 %v32, %v157
    %v159 = vpop.f32.mrf.mxu0
    %v160 = vadd.f32 %v32, %v159
    %161 = vmatprep.mubr.f32.mxu0 0.0
    %162 = vmatmul.mubr.f32.gmra.mxu0 %v68
    %v163 = vpop.f32.mrf.mxu0
    %v164 = vadd.f32 %v37, %v163
    %v165 = vpop.f32.mrf.mxu0
    %v166 = vadd.f32 %v37, %v165
    %167 = vmatprep.mubr.f32.mxu0 0.0
    %168 = vmatmul.mubr.f32.gmra.mxu0 %v71
    %v169 = vpop.f32.mrf.mxu0
    %v170 = vadd.f32 %v42, %v169
    %v171 = vpop.f32.mrf.mxu0
    %v172 = vadd.f32 %v42, %v171
    %173 = vmatprep.mubr.f32.mxu0 0.0
    %174 = vmatmul.mubr.f32.gmra.mxu0 %v74
    %v175 = vpop.f32.mrf.mxu0
    %v176 = vadd.f32 %v47, %v175
    %v177 = vpop.f32.mrf.mxu0
    %v178 = vadd.f32 %v47, %v177
    %179 = vmatprep.mubr.f32.mxu0 0.0
    %180 = vmatmul.mubr.f32.gmra.mxu0 %v77
    %v181 = vpop.f32.mrf.mxu0
    %v182 = vadd.f32 %v52, %v181
    %v183 = vpop.f32.mrf.mxu0
    %v184 = vadd.f32 %v52, %v183
    %185 = vmatprep.mubr.f32.mxu0 0.0
    %186 = vmatmul.mubr.f32.gmra.mxu0 %v80
    %v187 = vpop.f32.mrf.mxu0
    %v188 = vadd.f32 %v57, %v187
    %v189 = vpop.f32.mrf.mxu0
    %v190 = vadd.f32 %v57, %v189
    %191 = vdwg.mxu0
    %192 = vmatprep.subr.mxu0 0.0
    %193 = vmatpush1.msra.mxu0 0.0
    %194 = vmatprep.subr.mxu0 0.0
    %195 = vmatpush1.msra.mxu0 0.0
    %196 = vmatprep.subr.mxu0 0.0
    %197 = vmatpush1.msra.mxu0 0.0
    %198 = vmatprep.subr.mxu0 0.0
    %199 = vmatpush1.msra.mxu0 0.0
    %200 = vmatprep.subr.mxu0 0.0
    %201 = vmatpush1.msra.mxu0 0.0
    %202 = vmatprep.subr.mxu0 0.0
    %203 = vmatpush1.msra.mxu0 0.0
    %204 = vmatprep.subr.mxu0 0.0
    %205 = vmatpush1.msra.mxu0 0.0
    %206 = vmatprep.subr.mxu0 0.0
    %207 = vmatpush1.msra.mxu0 0.0
    %208 = vmatprep.subr.mxu0 0.0
    %209 = vmatpush1.msra.mxu0 0.0
    %210 = vmatprep.subr.mxu0 0.0
    %211 = vmatpush1.msra.mxu0 0.0
    %212 = vmatprep.subr.mxu0 0.0
    %213 = vmatpush1.msra.mxu0 0.0
    %214 = vmatprep.subr.mxu0 0.0
    %215 = vmatpush1.msra.mxu0 0.0
    %216 = vmatprep.subr.mxu0 0.0
    %217 = vmatpush1.msra.mxu0 0.0
    %218 = vmatprep.subr.mxu0 0.0
    %219 = vmatpush1.msra.mxu0 0.0
    %220 = vmatprep.subr.mxu0 0.0
    %221 = vmatpush1.msra.mxu0 0.0
    %222 = vmatprep.subr.mxu0 %v89
    %223 = vmatpush1.msra.mxu0 %v87
    %224 = vmatprep.subr.mxu0 0.0
    %225 = vmatpush2.msra.mxu0 0.0
    %226 = vmatprep.subr.mxu0 0.0
    %227 = vmatpush2.msra.mxu0 0.0
    %228 = vmatprep.subr.mxu0 0.0
    %229 = vmatpush2.msra.mxu0 0.0
    %230 = vmatprep.subr.mxu0 0.0
    %231 = vmatpush2.msra.mxu0 0.0
    %232 = vmatprep.subr.mxu0 0.0
    %233 = vmatpush2.msra.mxu0 0.0
    %234 = vmatprep.subr.mxu0 0.0
    %235 = vmatpush2.msra.mxu0 0.0
    %236 = vmatprep.subr.mxu0 0.0
    %237 = vmatpush2.msra.mxu0 0.0
    %238 = vmatprep.subr.mxu0 0.0
    %239 = vmatpush2.msra.mxu0 0.0
    %240 = vmatprep.subr.mxu0 0.0
    %241 = vmatpush2.msra.mxu0 0.0
    %242 = vmatprep.subr.mxu0 0.0
    %243 = vmatpush2.msra.mxu0 0.0
    %244 = vmatprep.subr.mxu0 0.0
    %245 = vmatpush2.msra.mxu0 0.0
    %246 = vmatprep.subr.mxu0 0.0
    %247 = vmatpush2.msra.mxu0 0.0
    %248 = vmatprep.subr.mxu0 0.0
    %249 = vmatpush2.msra.mxu0 0.0
    %250 = vmatprep.subr.mxu0 0.0
    %251 = vmatpush2.msra.mxu0 0.0
    %252 = vmatprep.subr.mxu0 0.0
    %253 = vmatpush2.msra.mxu0 0.0
    %254 = vmatprep.subr.mxu0 0.0
    %255 = vmatpush2.msra.mxu0 0.0
    %256 = vmatprep.mubr.f32.mxu0 0.0
    %257 = vmatmul.mubr.f32.gmra.mxu0 %v65
    %v258 = vpop.f32.mrf.mxu0
    %v259 = vadd.f32 %v32, %v258
    %v260 = vpop.f32.mrf.mxu0
    %v261 = vadd.f32 %v32, %v260
    %262 = vmatprep.mubr.f32.mxu0 0.0
    %263 = vmatmul.mubr.f32.gmra.mxu0 %v68
    %v264 = vpop.f32.mrf.mxu0
    %v265 = vadd.f32 %v37, %v264
    %v266 = vpop.f32.mrf.mxu0
    %v267 = vadd.f32 %v37, %v266
    %268 = vmatprep.mubr.f32.mxu0 0.0
    %269 = vmatmul.mubr.f32.gmra.mxu0 %v71
    %v270 = vpop.f32.mrf.mxu0
    %v271 = vadd.f32 %v42, %v270
    %v272 = vpop.f32.mrf.mxu0
    %v273 = vadd.f32 %v42, %v272
    %274 = vmatprep.mubr.f32.mxu0 0.0
    %275 = vmatmul.mubr.f32.gmra.mxu0 %v74
    %v276 = vpop.f32.mrf.mxu0
    %v277 = vadd.f32 %v47, %v276
    %v278 = vpop.f32.mrf.mxu0
    %v279 = vadd.f32 %v47, %v278
    %280 = vmatprep.mubr.f32.mxu0 0.0
    %281 = vmatmul.mubr.f32.gmra.mxu0 %v77
    %v282 = vpop.f32.mrf.mxu0
    %v283 = vadd.f32 %v52, %v282
    %v284 = vpop.f32.mrf.mxu0
    %v285 = vadd.f32 %v52, %v284
    %286 = vmatprep.mubr.f32.mxu0 0.0
    %287 = vmatmul.mubr.f32.gmra.mxu0 %v80
    %v288 = vpop.f32.mrf.mxu0
    %v289 = vadd.f32 %v57, %v288
    %v290 = vpop.f32.mrf.mxu0
    %v291 = vadd.f32 %v57, %v290
    %292 = vdwg.mxu0
    %293 = vst [vmem:[#allocation2] sm:$0xff] %v158
    %294 = vst [vmem:[#allocation2 + $0x8] sm:$0xff] %v160
    %295 = vst [vmem:[#allocation2 + $0x10] sm:$0xff] %v259
    %296 = vst [vmem:[#allocation2 + $0x18] sm:$0xff] %v261
    %297 = vst [vmem:[#allocation2 + $0x20] sm:$0xff] %v164
    %298 = vst [vmem:[#allocation2 + $0x28] sm:$0xff] %v166
    %299 = vst [vmem:[#allocation2 + $0x30] sm:$0xff] %v265
    %300 = vst [vmem:[#allocation2 + $0x38] sm:$0xff] %v267
    %301 = vst [vmem:[#allocation2 + $0x40] sm:$0xff] %v170
    %302 = vst [vmem:[#allocation2 + $0x48] sm:$0xff] %v172
    %303 = vst [vmem:[#allocation2 + $0x50] sm:$0xff] %v271
    %304 = vst [vmem:[#allocation2 + $0x58] sm:$0xff] %v273
    %305 = vst [vmem:[#allocation2 + $0x60] sm:$0xff] %v176
    %306 = vst [vmem:[#allocation2 + $0x68] sm:$0xff] %v178
    %307 = vst [vmem:[#allocation2 + $0x70] sm:$0xff] %v277
    %308 = vst [vmem:[#allocation2 + $0x78] sm:$0xff] %v279
    %309 = vst [vmem:[#allocation2 + $0x80] sm:$0xff] %v182
    %310 = vst [vmem:[#allocation2 + $0x88] sm:$0xff] %v184
    %311 = vst [vmem:[#allocation2 + $0x90] sm:$0xff] %v283
    %312 = vst [vmem:[#allocation2 + $0x98] sm:$0xff] %v285
    %313 = vst [vmem:[#allocation2 + $0xa0] sm:$0x3] %v188
    %314 = vst [vmem:[#allocation2 + $0xa8] sm:$0x3] %v190
    %315 = vst [vmem:[#allocation2 + $0xb0] sm:$0x3] %v289
    %316 = vst [vmem:[#allocation2 + $0xb8] sm:$0x3] %v291
    // Predicated region
    $region14: #{tpu_custom_call.1} parent=1 // pred_check
      _
    $region15: #{tpu_custom_call.1} parent=1 // pred_check_branch
      %318 = sbr.rel (0) target = $region17
    $region16: #{tpu_custom_call.1} parent=1 // pred_region
      %s320 = ssub.s32 3072, 3072
      %321 = vsyncadd [#allocation3], %s320
      %s322 = sshll.u32 [#allocation2], 4
      %s323 = int_to_ptr.vmem [resolvable:$true] %s322
      %328 = dma.vmem_to_hbm [thread:$0]  %s323, 3072, %s3, [#allocation3], 512, 512, 32
    $region17: #{tpu_custom_call.1} parent=1 // pred_fallthru
      _
    // Predicated region
    $region18: #{tpu_custom_call.1} parent=1 // pred_check
      _
    $region19: #{tpu_custom_call.1} parent=1 // pred_check_branch
      %330 = sbr.rel (0) target = $region21
    $region20: #{tpu_custom_call.1} parent=1 // pred_region
      %331 = dma.done [#allocation3], 3072
    $region21: #{tpu_custom_call.1} parent=1 // pred_fallthru
      _
    %332 = vsyncpa [#allocation3], 1

</llo_original>
